<compile_context>
chip_gen: v7x
topology: tpu7x:2x2x1
jax: 0.10.0
libtpu: 0.0.40
codegen_flags: <defaults>
</compile_context>

<pallas_src>
import functools

import jax
import jax.numpy as jnp
import numpy as np
from jax.experimental import pallas as pl
from jax.experimental.pallas import tpu as pltpu

LN_EPS = 1e-5  # torch.nn.LayerNorm default


def _round_up(x, m):
    return (x + m - 1) // m * m


def _patch_embed_kernel(p_ref, w_ref, b_ref, g_ref, beta_ref, o_ref, *,
                        e_true, eps):
    # p_ref: (tm, Kpad)  w_ref: (Kpad, Epad)  b/g/beta: (1, Epad)  o_ref: (tm, Epad)
    acc = jnp.dot(p_ref[...], w_ref[...], preferred_element_type=jnp.float32)
    acc = acc + b_ref[...]                                   # broadcast (1, Epad)

    # LayerNorm over the true embed dim.  Padded weight/bias columns are zero,
    # so padded acc columns are exactly 0 -> the plain sum already gives the
    # correct mean; the variance is masked explicitly.
    inv_e = jnp.float32(1.0 / e_true)
    mean = jnp.sum(acc, axis=-1, keepdims=True) * inv_e
    col = jax.lax.broadcasted_iota(jnp.int32, (1, acc.shape[-1]), 1)
    feat_mask = (col < e_true).astype(jnp.float32)           # (1, Epad)
    ctr = (acc - mean) * feat_mask
    var = jnp.sum(ctr * ctr, axis=-1, keepdims=True) * inv_e
    xhat = ctr * jax.lax.rsqrt(var + eps)                    # rsqrt -> EUP slot
    o_ref[...] = (xhat * g_ref[...] + beta_ref[...]).astype(o_ref.dtype)


def _extract_patches(x, kernel_size, stride, padding):
    """(B, C, H, W) -> (B*Ho*Wo, KH*KW*C) using static strided slices only."""
    B, C, H, W = x.shape
    k, s, p = kernel_size, stride, padding
    xp = jnp.pad(x, ((0, 0), (0, 0), (p, p), (p, p)))
    Hp, Wp = H + 2 * p, W + 2 * p
    Ho = (Hp - k) // s + 1
    Wo = (Wp - k) // s + 1
    xp = jnp.transpose(xp, (0, 2, 3, 1))                     # (B, Hp, Wp, C)
    pieces = []
    for dh in range(k):
        for dw in range(k):
            sl = jax.lax.slice(
                xp,
                (0, dh, dw, 0),
                (B, dh + (Ho - 1) * s + 1, dw + (Wo - 1) * s + 1, C),
                (1, s, s, 1))                                # (B, Ho, Wo, C)
            pieces.append(sl)
    pat = jnp.stack(pieces, axis=3)                          # (B, Ho, Wo, k*k, C)
    # feature ordering = (dh, dw, c) -> must match the weight reshape below.
    return pat.reshape(B * Ho * Wo, k * k * C), Ho, Wo


@functools.partial(jax.jit,
                   static_argnames=("kernel_size", "stride", "compute_dtype"))
def overlap_patch_embed(x, proj_w, proj_b, ln_w, ln_b, *,
                        kernel_size, stride, compute_dtype=jnp.float32):
    """x: (B, C, H, W) float32. Returns (y, Ho, Wo) with y: (B, Ho*Wo, E) float32."""
    B = x.shape[0]
    E = proj_w.shape[0]
    padding = kernel_size // 2

    patches, Ho, Wo = _extract_patches(x, kernel_size, stride, padding)
    M, K = patches.shape

    # Lane-align the contraction and embed dims.
    Kpad = _round_up(K, 128)
    Epad = _round_up(E, 128)

    # Large row tile (up to 512 rows, multiple of 8); pad M so the grid is uniform.
    tm = min(512, _round_up(M, 8))
    M_pad = _round_up(M, tm)
    grid = (M_pad // tm,)

    patches = jnp.pad(patches, ((0, M_pad - M), (0, Kpad - K)))
    patches = patches.astype(compute_dtype)

    # (E, C, KH, KW) -> (KH, KW, C, E) -> (K, E): matches patch feature order (dh, dw, c).
    w_mat = jnp.transpose(proj_w, (2, 3, 1, 0)).reshape(K, E)
    w_mat = jnp.pad(w_mat, ((0, Kpad - K), (0, Epad - E))).astype(compute_dtype)

    b_row = jnp.pad(proj_b, (0, Epad - E)).reshape(1, Epad).astype(jnp.float32)
    g_row = jnp.pad(ln_w, (0, Epad - E)).reshape(1, Epad).astype(jnp.float32)
    beta_row = jnp.pad(ln_b, (0, Epad - E)).reshape(1, Epad).astype(jnp.float32)

    kernel = functools.partial(_patch_embed_kernel, e_true=E, eps=LN_EPS)

    y = pl.pallas_call(
        kernel,
        out_shape=jax.ShapeDtypeStruct((M_pad, Epad), jnp.float32),
        grid_spec=pltpu.PrefetchScalarGridSpec(
            num_scalar_prefetch=0,
            grid=grid,
            in_specs=[
                pl.BlockSpec((tm, Kpad), lambda i: (i, 0)),
                pl.BlockSpec((Kpad, Epad), lambda i: (0, 0)),
                pl.BlockSpec((1, Epad), lambda i: (0, 0)),
                pl.BlockSpec((1, Epad), lambda i: (0, 0)),
                pl.BlockSpec((1, Epad), lambda i: (0, 0)),
            ],
            out_specs=pl.BlockSpec((tm, Epad), lambda i: (i, 0)),
        ),
        compiler_params=pltpu.CompilerParams(
            dimension_semantics=("parallel",)),
    )(patches, w_mat, b_row, g_row, beta_row)

    y = y[:M, :E].reshape(B, Ho * Wo, E)
    return y, Ho, Wo


def _reference(x, proj_w, proj_b, ln_w, ln_b, kernel_size, stride):
    p = kernel_size // 2
    out = jax.lax.conv_general_dilated(
        x, proj_w, window_strides=(stride, stride),
        padding=[(p, p), (p, p)],
        dimension_numbers=("NCHW", "OIHW", "NCHW"))
    out = out + proj_b[None, :, None, None]
    B, E, Ho, Wo = out.shape
    out = out.reshape(B, E, Ho * Wo).transpose(0, 2, 1)      # (B, N, E)
    mean = out.mean(-1, keepdims=True)
    var = ((out - mean) ** 2).mean(-1, keepdims=True)
    return (out - mean) / jnp.sqrt(var + LN_EPS) * ln_w + ln_b, Ho, Wo


if __name__ == "__main__":
    # Small, module-consistent shapes: batch=2, in_chans=4, img 16x16,
    # patch_size=7, stride=4, embed_dim=32.
    B, C, Himg, Wimg = 2, 4, 16, 16
    kernel_size, stride, embed_dim = 7, 4, 32

    key = jax.random.PRNGKey(0)
    kx, kw = jax.random.split(key)
    x = jax.random.normal(kx, (B, C, Himg, Wimg), dtype=jnp.float32)

    # Parameter init mirroring the module's _init_weights:
    # Conv2d: weight ~ N(0, sqrt(2 / fan_out)), bias = 0; LayerNorm: w=1, b=0.
    fan_out = kernel_size * kernel_size * embed_dim
    proj_w = jax.random.normal(
        kw, (embed_dim, C, kernel_size, kernel_size), dtype=jnp.float32
    ) * np.sqrt(2.0 / fan_out)
    proj_b = jnp.zeros((embed_dim,), dtype=jnp.float32)
    ln_w = jnp.ones((embed_dim,), dtype=jnp.float32)
    ln_b = jnp.zeros((embed_dim,), dtype=jnp.float32)

    # TODO(synk): use_dcn=True path (torchvision deform_conv2d) not implemented;
    # this kernel reproduces the default forward (use_dcn=False).

    y_ref, Ho_ref, Wo_ref = _reference(
        x, proj_w, proj_b, ln_w, ln_b, kernel_size, stride)

    # f32 path: faithful to the PyTorch module's numerics.
    y, Ho, Wo = overlap_patch_embed(
        x, proj_w, proj_b, ln_w, ln_b,
        kernel_size=kernel_size, stride=stride, compute_dtype=jnp.float32)
    y = jax.block_until_ready(y)
    Ho, Wo = int(Ho), int(Wo)
    assert (Ho, Wo) == (Ho_ref, Wo_ref)
    assert y.shape == y_ref.shape == (B, Ho * Wo, embed_dim)
    np.testing.assert_allclose(np.asarray(y), np.asarray(y_ref),
                               atol=1e-4, rtol=1e-4)

    # bf16 matmul-operand path (f32 accumulation + LayerNorm): looser tolerance.
    y16, _, _ = overlap_patch_embed(
        x, proj_w, proj_b, ln_w, ln_b,
        kernel_size=kernel_size, stride=stride, compute_dtype=jnp.bfloat16)
    y16 = jax.block_until_ready(y16)
    np.testing.assert_allclose(np.asarray(y16), np.asarray(y_ref),
                               atol=5e-2, rtol=5e-2)

    print("KERNEL_OK")
</pallas_src>

<mosaic_0001>
module attributes {stable_mosaic.version = 11 : i64} {
  func.func @_patch_embed_kernel(%arg0: i32, %arg1: memref<32x256xf32, #tpu.memory_space<vmem>>, %arg2: memref<256x128xf32, #tpu.memory_space<vmem>>, %arg3: memref<1x128xf32, #tpu.memory_space<vmem>>, %arg4: memref<1x128xf32, #tpu.memory_space<vmem>>, %arg5: memref<1x128xf32, #tpu.memory_space<vmem>>, %arg6: memref<32x128xf32, #tpu.memory_space<vmem>>) attributes {dimension_semantics = [#tpu.dimension_semantics<parallel>], iteration_bounds = array<i64: 1>, scalar_prefetch = 0 : i64, scratch_operands = 0 : i64, tpu.core_type = #tpu.core_type<tc>, window_params = [{transform_indices = @transform_0, window_bounds = array<i64: 32, 256>}, {pipeline_mode = #tpu.pipeline_mode<synchronous>, transform_indices = @transform_1, window_bounds = array<i64: 256, 128>}, {pipeline_mode = #tpu.pipeline_mode<synchronous>, transform_indices = @transform_2, window_bounds = array<i64: 1, 128>}, {pipeline_mode = #tpu.pipeline_mode<synchronous>, transform_indices = @transform_3, window_bounds = array<i64: 1, 128>}, {pipeline_mode = #tpu.pipeline_mode<synchronous>, transform_indices = @transform_4, window_bounds = array<i64: 1, 128>}, {transform_indices = @transform_5, window_bounds = array<i64: 32, 128>}]} {
    %c0 = arith.constant 0 : index
    %c0_0 = arith.constant 0 : index
    %0 = vector.load %arg1[%c0, %c0_0] : memref<32x256xf32, #tpu.memory_space<vmem>>, vector<32x256xf32>
    %c0_1 = arith.constant 0 : index
    %c0_2 = arith.constant 0 : index
    %1 = vector.load %arg2[%c0_1, %c0_2] : memref<256x128xf32, #tpu.memory_space<vmem>>, vector<256x128xf32>
    %cst = arith.constant dense<0.000000e+00> : vector<32x128xf32>
    %2 = tpu.matmul %0, %1, %cst {dimension_numbers = #tpu.dot_dimension_numbers<[1], [0], [0], [1], [0, 0, 1, 1], [], []>} : vector<32x256xf32>, vector<256x128xf32>, vector<32x128xf32> -> vector<32x128xf32>
    %c0_3 = arith.constant 0 : index
    %c0_4 = arith.constant 0 : index
    %3 = vector.load %arg3[%c0_3, %c0_4] : memref<1x128xf32, #tpu.memory_space<vmem>>, vector<1x128xf32>
    %4 = vector.broadcast %3 : vector<1x128xf32> to vector<32x128xf32>
    %5 = arith.addf %2, %4 : vector<32x128xf32>
    %cst_5 = arith.constant dense<0.000000e+00> : vector<32xf32>
    %6 = vector.multi_reduction <add>, %5, %cst_5 [1] : vector<32x128xf32> to vector<32xf32>
    %7 = vector.shape_cast %6 : vector<32xf32> to vector<32x1xf32>
    %cst_6 = arith.constant 3.125000e-02 : f32
    %8 = vector.broadcast %cst_6 : f32 to vector<32x1xf32>
    %9 = arith.mulf %7, %8 : vector<32x1xf32>
    %10 = tpu.iota {dimensions = array<i32: 1>} : vector<1x128xi32>
    %c32_i32 = arith.constant 32 : i32
    %11 = vector.broadcast %c32_i32 : i32 to vector<1x128xi32>
    %12 = arith.cmpi slt, %10, %11 : vector<1x128xi32>
    %13 = arith.extui %12 : vector<1x128xi1> to vector<1x128xi32>
    %14 = arith.sitofp %13 : vector<1x128xi32> to vector<1x128xf32>
    %15 = vector.broadcast %9 : vector<32x1xf32> to vector<32x128xf32>
    %16 = arith.subf %5, %15 : vector<32x128xf32>
    %17 = vector.broadcast %14 : vector<1x128xf32> to vector<32x128xf32>
    %18 = arith.mulf %16, %17 : vector<32x128xf32>
    %19 = arith.mulf %18, %18 : vector<32x128xf32>
    %cst_7 = arith.constant dense<0.000000e+00> : vector<32xf32>
    %20 = vector.multi_reduction <add>, %19, %cst_7 [1] : vector<32x128xf32> to vector<32xf32>
    %21 = vector.shape_cast %20 : vector<32xf32> to vector<32x1xf32>
    %cst_8 = arith.constant 3.125000e-02 : f32
    %22 = vector.broadcast %cst_8 : f32 to vector<32x1xf32>
    %23 = arith.mulf %21, %22 : vector<32x1xf32>
    %cst_9 = arith.constant 9.99999974E-6 : f32
    %24 = vector.broadcast %cst_9 : f32 to vector<32x1xf32>
    %25 = arith.addf %23, %24 : vector<32x1xf32>
    %26 = math.rsqrt %25 : vector<32x1xf32>
    %27 = vector.broadcast %26 : vector<32x1xf32> to vector<32x128xf32>
    %28 = arith.mulf %18, %27 : vector<32x128xf32>
    %c0_10 = arith.constant 0 : index
    %c0_11 = arith.constant 0 : index
    %29 = vector.load %arg4[%c0_10, %c0_11] : memref<1x128xf32, #tpu.memory_space<vmem>>, vector<1x128xf32>
    %30 = vector.broadcast %29 : vector<1x128xf32> to vector<32x128xf32>
    %31 = arith.mulf %28, %30 : vector<32x128xf32>
    %c0_12 = arith.constant 0 : index
    %c0_13 = arith.constant 0 : index
    %32 = vector.load %arg5[%c0_12, %c0_13] : memref<1x128xf32, #tpu.memory_space<vmem>>, vector<1x128xf32>
    %33 = vector.broadcast %32 : vector<1x128xf32> to vector<32x128xf32>
    %34 = arith.addf %31, %33 : vector<32x128xf32>
    %c0_14 = arith.constant 0 : index
    %c0_15 = arith.constant 0 : index
    %35 = vector.load %arg6[%c0_14, %c0_15] : memref<32x128xf32, #tpu.memory_space<vmem>>, vector<32x128xf32>
    tpu.vector_store %arg6[%c0_14, %c0_15], %34 {strides = array<i32>} : memref<32x128xf32, #tpu.memory_space<vmem>>, vector<32x128xf32>,
    return
  }
  func.func @transform_0(%arg0: i32) -> (i32, i32) {
    %c0_i32 = arith.constant 0 : i32
    %c0_i32_0 = arith.constant 0 : i32
    return %arg0, %c0_i32 : i32, i32
  }
  func.func @transform_1(%arg0: i32) -> (i32, i32) {
    %c0_i32 = arith.constant 0 : i32
    %c0_i32_0 = arith.constant 0 : i32
    %c0_i32_1 = arith.constant 0 : i32
    return %c0_i32, %c0_i32_0 : i32, i32
  }
  func.func @transform_2(%arg0: i32) -> (i32, i32) {
    %c0_i32 = arith.constant 0 : i32
    %c0_i32_0 = arith.constant 0 : i32
    %c0_i32_1 = arith.constant 0 : i32
    return %c0_i32, %c0_i32_0 : i32, i32
  }
  func.func @transform_3(%arg0: i32) -> (i32, i32) {
    %c0_i32 = arith.constant 0 : i32
    %c0_i32_0 = arith.constant 0 : i32
    %c0_i32_1 = arith.constant 0 : i32
    return %c0_i32, %c0_i32_0 : i32, i32
  }
  func.func @transform_4(%arg0: i32) -> (i32, i32) {
    %c0_i32 = arith.constant 0 : i32
    %c0_i32_0 = arith.constant 0 : i32
    %c0_i32_1 = arith.constant 0 : i32
    return %c0_i32, %c0_i32_0 : i32, i32
  }
  func.func @transform_5(%arg0: i32) -> (i32, i32) {
    %c0_i32 = arith.constant 0 : i32
    %c0_i32_0 = arith.constant 0 : i32
    return %arg0, %c0_i32 : i32, i32
  }
}

</mosaic_0001>

<llo_original>
// kernel: overlap_patch_embed.1
$region0: #{overlap_patch_embed.1}
  #allocation0 [shape = 'u32[]', space=smem, size = 0x4, offset = 0x4, fixed_abs, tag = 'smem constant byte address 0x4 - core index']
  #allocation1 [shape = 'u32[144,128]{1,0:T(1,128)}', space=vmem, size = 0x12000, scoped, tag = 'internal scratch']
  %s0 = inlined_call_operand.vmem [shape: f32[32,256], index: 0, kind: input, shape index: {}]
  %s1 = inlined_call_operand.vmem [shape: f32[256,128], index: 1, kind: input, shape index: {}]
  %s2 = inlined_call_operand.vmem [shape: f32[1,128], index: 2, kind: input, shape index: {}]
  %s3 = inlined_call_operand.vmem [shape: f32[1,128], index: 3, kind: input, shape index: {}]
  %s4 = inlined_call_operand.vmem [shape: f32[1,128], index: 4, kind: input, shape index: {}]
  %s5 = inlined_call_operand.hbm [shape: f32[32,128], index: 5, kind: output, shape index: {}]
  %s6 = sld [smem:[#allocation0]]
  $region30: #{overlap_patch_embed.1} parent=0
    _
  %s8 = ssub.s32 1, %s6
  %s9 = scalar_select 0, %s8, %s6
  $region1: #{overlap_patch_embed.1} parent=0
    #allocation2 [shape = 'u8[16384]{0}', space=vmem, size = 0x4000, scoped, tag = 'output window, operand 0, single buffered']
    #allocation3 [shape = 's32[1]{0}', space=sflag, size = 0x4, scoped, tag = 'scoped memory for overlap_patch_embed.1']
    %10 = vsyncpa [#allocation3], 0
    // Predicated region
    $region2: #{overlap_patch_embed.1} parent=1 // pred_check
      _
    $region3: #{overlap_patch_embed.1} parent=1 // pred_check_branch
      %12 = sbr.rel (0) target = $region5
    $region4: #{overlap_patch_embed.1} parent=1 // pred_region
      _
    $region5: #{overlap_patch_embed.1} parent=1 // pred_fallthru
      _
    // Predicated region
    $region6: #{overlap_patch_embed.1} parent=1 // pred_check
      _
    $region7: #{overlap_patch_embed.1} parent=1 // pred_check_branch
      %14 = sbr.rel (0) target = $region9
    $region8: #{overlap_patch_embed.1} parent=1 // pred_region
      _
    $region9: #{overlap_patch_embed.1} parent=1 // pred_fallthru
      _
    // Predicated region
    $region10: #{overlap_patch_embed.1} parent=1 // pred_check
      _
    $region11: #{overlap_patch_embed.1} parent=1 // pred_check_branch
      %16 = sbr.rel (0) target = $region13
    $region12: #{overlap_patch_embed.1} parent=1 // pred_region
      _
    $region13: #{overlap_patch_embed.1} parent=1 // pred_fallthru
      _
    // Predicated region
    $region14: #{overlap_patch_embed.1} parent=1 // pred_check
      _
    $region15: #{overlap_patch_embed.1} parent=1 // pred_check_branch
      %18 = sbr.rel (0) target = $region17
    $region16: #{overlap_patch_embed.1} parent=1 // pred_region
      _
    $region17: #{overlap_patch_embed.1} parent=1 // pred_fallthru
      _
    // Predicated region
    $region18: #{overlap_patch_embed.1} parent=1 // pred_check
      _
    $region19: #{overlap_patch_embed.1} parent=1 // pred_check_branch
      %20 = sbr.rel (0) target = $region21
    $region20: #{overlap_patch_embed.1} parent=1 // pred_region
      _
    $region21: #{overlap_patch_embed.1} parent=1 // pred_fallthru
      _
    %v21 = vld [vmem:[%s0] sm:$0xff]
    %v22 = vld [vmem:[%s0 + $0x8] sm:$0xff]
    %v23 = vld [vmem:[%s0 + $0x10] sm:$0xff]
    %v24 = vld [vmem:[%s0 + $0x18] sm:$0xff]
    %v25 = vld [vmem:[%s0 + $0x20] sm:$0xff]
    %v26 = vld [vmem:[%s0 + $0x28] sm:$0xff]
    %v27 = vld [vmem:[%s0 + $0x30] sm:$0xff]
    %v28 = vld [vmem:[%s0 + $0x38] sm:$0xff]
    %v29 = vld [vmem:[%s1] sm:$0xff]
    %v30 = vld [vmem:[%s1 + $0x8] sm:$0xff]
    %v31 = vld [vmem:[%s1 + $0x10] sm:$0xff]
    %v32 = vld [vmem:[%s1 + $0x18] sm:$0xff]
    %v33 = vld [vmem:[%s1 + $0x20] sm:$0xff]
    %v34 = vld [vmem:[%s1 + $0x28] sm:$0xff]
    %v35 = vld [vmem:[%s1 + $0x30] sm:$0xff]
    %v36 = vld [vmem:[%s1 + $0x38] sm:$0xff]
    %v37 = vld [vmem:[%s1 + $0x40] sm:$0xff]
    %v38 = vld [vmem:[%s1 + $0x48] sm:$0xff]
    %v39 = vld [vmem:[%s1 + $0x50] sm:$0xff]
    %v40 = vld [vmem:[%s1 + $0x58] sm:$0xff]
    %v41 = vld [vmem:[%s1 + $0x60] sm:$0xff]
    %v42 = vld [vmem:[%s1 + $0x68] sm:$0xff]
    %v43 = vld [vmem:[%s1 + $0x70] sm:$0xff]
    %v44 = vld [vmem:[%s1 + $0x78] sm:$0xff]
    %v45 = vld [vmem:[%s1 + $0x80] sm:$0xff]
    %v46 = vld [vmem:[%s1 + $0x88] sm:$0xff]
    %v47 = vld [vmem:[%s1 + $0x90] sm:$0xff]
    %v48 = vld [vmem:[%s1 + $0x98] sm:$0xff]
    %v49 = vld [vmem:[%s1 + $0xa0] sm:$0xff]
    %v50 = vld [vmem:[%s1 + $0xa8] sm:$0xff]
    %v51 = vld [vmem:[%s1 + $0xb0] sm:$0xff]
    %v52 = vld [vmem:[%s1 + $0xb8] sm:$0xff]
    %v53 = vld [vmem:[%s1 + $0xc0] sm:$0xff]
    %v54 = vld [vmem:[%s1 + $0xc8] sm:$0xff]
    %v55 = vld [vmem:[%s1 + $0xd0] sm:$0xff]
    %v56 = vld [vmem:[%s1 + $0xd8] sm:$0xff]
    %v57 = vld [vmem:[%s1 + $0xe0] sm:$0xff]
    %v58 = vld [vmem:[%s1 + $0xe8] sm:$0xff]
    %v59 = vld [vmem:[%s1 + $0xf0] sm:$0xff]
    %v60 = vld [vmem:[%s1 + $0xf8] sm:$0xff]
    %v61 = vld [vmem:[%s2] sm:$0x1]
    %v63 = vlaneseq
    %v64 = vshrl.u32 %v63, 7
    %v65 = vsub.s32 0, %v64
    %v66 = vrot.slane %v61, %v65
    %68 = vmatprep.subr.mxu0 0.0
    %69 = vmatpush1.msra.mxu0 %v29
    %70 = vmatprep.subr.mxu0 0.0
    %71 = vmatpush1.msra.mxu0 %v30
    %72 = vmatprep.subr.mxu0 0.0
    %73 = vmatpush1.msra.mxu0 %v31
    %74 = vmatprep.subr.mxu0 0.0
    %75 = vmatpush1.msra.mxu0 %v32
    %76 = vmatprep.subr.mxu0 0.0
    %77 = vmatpush1.msra.mxu0 %v33
    %78 = vmatprep.subr.mxu0 0.0
    %79 = vmatpush1.msra.mxu0 %v34
    %80 = vmatprep.subr.mxu0 0.0
    %81 = vmatpush1.msra.mxu0 %v35
    %82 = vmatprep.subr.mxu0 0.0
    %83 = vmatpush1.msra.mxu0 %v36
    %84 = vmatprep.subr.mxu0 0.0
    %85 = vmatpush1.msra.mxu0 %v37
    %86 = vmatprep.subr.mxu0 0.0
    %87 = vmatpush1.msra.mxu0 %v38
    %88 = vmatprep.subr.mxu0 0.0
    %89 = vmatpush1.msra.mxu0 %v39
    %90 = vmatprep.subr.mxu0 0.0
    %91 = vmatpush1.msra.mxu0 %v40
    %92 = vmatprep.subr.mxu0 0.0
    %93 = vmatpush1.msra.mxu0 %v41
    %94 = vmatprep.subr.mxu0 0.0
    %95 = vmatpush1.msra.mxu0 %v42
    %96 = vmatprep.subr.mxu0 0.0
    %97 = vmatpush1.msra.mxu0 %v43
    %98 = vmatprep.subr.mxu0 0.0
    %99 = vmatpush1.msra.mxu0 %v44
    %100 = vmatprep.subr.mxu0 0.0
    %101 = vmatpush1.msra.mxu0 %v45
    %102 = vmatprep.subr.mxu0 0.0
    %103 = vmatpush1.msra.mxu0 %v46
    %104 = vmatprep.subr.mxu0 0.0
    %105 = vmatpush1.msra.mxu0 %v47
    %106 = vmatprep.subr.mxu0 0.0
    %107 = vmatpush1.msra.mxu0 %v48
    %108 = vmatprep.subr.mxu0 0.0
    %109 = vmatpush1.msra.mxu0 %v49
    %110 = vmatprep.subr.mxu0 0.0
    %111 = vmatpush1.msra.mxu0 %v50
    %112 = vmatprep.subr.mxu0 0.0
    %113 = vmatpush1.msra.mxu0 %v51
    %114 = vmatprep.subr.mxu0 0.0
    %115 = vmatpush1.msra.mxu0 %v52
    %116 = vmatprep.subr.mxu0 0.0
    %117 = vmatpush1.msra.mxu0 %v53
    %118 = vmatprep.subr.mxu0 0.0
    %119 = vmatpush1.msra.mxu0 %v54
    %120 = vmatprep.subr.mxu0 0.0
    %121 = vmatpush1.msra.mxu0 %v55
    %122 = vmatprep.subr.mxu0 0.0
    %123 = vmatpush1.msra.mxu0 %v56
    %124 = vmatprep.subr.mxu0 0.0
    %125 = vmatpush1.msra.mxu0 %v57
    %126 = vmatprep.subr.mxu0 0.0
    %127 = vmatpush1.msra.mxu0 %v58
    %128 = vmatprep.subr.mxu0 0.0
    %129 = vmatpush1.msra.mxu0 %v59
    %130 = vmatprep.subr.mxu0 0.0
    %131 = vmatpush1.msra.mxu0 %v60
    %132 = vmatprep.mubr.f32.mxu0 %v22
    %133 = vmatmul.mubr.f32.gmra.mrb[0].mxu0 %v21
    %v134 = vpop.f32.mrb[0].mxu0
    %v135 = vadd.f32 %v66, %v134
    %v136 = vpop.f32.mrb[0].mxu0
    %137 = vmatprep.mubr.f32.mxu0 %v24
    %138 = vmatmul.mubr.f32.gmra.mrb[0].mxu0 %v23
    %v139 = vpop.f32.mrb[0].mxu0
    %v140 = vadd.f32 %v66, %v139
    %v141 = vpop.f32.mrb[0].mxu0
    %142 = vmatprep.mubr.f32.mxu0 %v26
    %143 = vmatmul.mubr.f32.gmra.mrb[0].mxu0 %v25
    %v144 = vpop.f32.mrb[0].mxu0
    %v145 = vadd.f32 %v66, %v144
    %v146 = vpop.f32.mrb[0].mxu0
    %147 = vmatprep.mubr.f32.mxu0 %v28
    %148 = vmatmul.mubr.f32.gmra.mrb[0].mxu0 %v27
    %v149 = vpop.f32.mrb[0].mxu0
    %v150 = vadd.f32 %v66, %v149
    %v151 = vpop.f32.mrb[0].mxu0
    %152 = vdwg.mxu0
    %153 = vadd.xlane.f32.xlu0 %v135
    %v154 = vpop.xlane.xlu0 %153
    %155 = vadd.xlane.f32.xlu0 %v140
    %v156 = vpop.xlane.xlu0 %155
    %157 = vadd.xlane.f32.xlu0 %v145
    %v158 = vpop.xlane.xlu0 %157
    %159 = vadd.xlane.f32.xlu0 %v150
    %v160 = vpop.xlane.xlu0 %159
    %v161 = vmul.f32 %v154, 0.03125
    %v162 = vmul.f32 %v156, 0.03125
    %v163 = vmul.f32 %v158, 0.03125
    %v164 = vmul.f32 %v160, 0.03125
    %v165 = vlaneseq
    %v166 = vand.u32 %v165, 127
    %vm167 = vcmp.lt.s32.totalorder %v166, 32
    %v168 = vsel %vm167, 1, 0
    %v169 = vcvt.s32.f32 %v168
    %v170 = vsub.f32 %v135, %v161
    %v171 = vsub.f32 %v140, %v162
    %v172 = vsub.f32 %v145, %v163
    %v173 = vsub.f32 %v150, %v164
    %v174 = vmul.f32 %v170, %v169
    %v175 = vmul.f32 %v171, %v169
    %v176 = vmul.f32 %v172, %v169
    %v177 = vmul.f32 %v173, %v169
    %v178 = vmul.f32 %v174, %v174
    %v179 = vmul.f32 %v175, %v175
    %v180 = vmul.f32 %v176, %v176
    %v181 = vmul.f32 %v177, %v177
    %182 = vadd.xlane.f32.xlu0 %v178
    %v183 = vpop.xlane.xlu0 %182
    %184 = vadd.xlane.f32.xlu0 %v179
    %v185 = vpop.xlane.xlu0 %184
    %186 = vadd.xlane.f32.xlu0 %v180
    %v187 = vpop.xlane.xlu0 %186
    %188 = vadd.xlane.f32.xlu0 %v181
    %v189 = vpop.xlane.xlu0 %188
    %v190 = vmul.f32 %v183, 0.03125
    %v191 = vmul.f32 %v185, 0.03125
    %v192 = vmul.f32 %v187, 0.03125
    %v193 = vmul.f32 %v189, 0.03125
    %v194 = vadd.f32 %v190, 1e-05
    %v195 = vadd.f32 %v191, 1e-05
    %v196 = vadd.f32 %v192, 1e-05
    %v197 = vadd.f32 %v193, 1e-05
    %v198 = vrsqrt.pop %v194
    %v199 = vrsqrt.pop %v195
    %v200 = vrsqrt.pop %v196
    %v201 = vrsqrt.pop %v197
    %v202 = vmul.f32 %v174, %v198
    %v203 = vmul.f32 %v175, %v199
    %v204 = vmul.f32 %v176, %v200
    %v205 = vmul.f32 %v177, %v201
    %v206 = vld [vmem:[%s3] sm:$0x1]
    %v208 = vlaneseq
    %v209 = vshrl.u32 %v208, 7
    %v210 = vsub.s32 0, %v209
    %v211 = vrot.slane %v206, %v210
    %v213 = vmul.f32 %v202, %v211
    %v214 = vmul.f32 %v203, %v211
    %v215 = vmul.f32 %v204, %v211
    %v216 = vmul.f32 %v205, %v211
    %v217 = vld [vmem:[%s4] sm:$0x1]
    %v219 = vlaneseq
    %v220 = vshrl.u32 %v219, 7
    %v221 = vsub.s32 0, %v220
    %v222 = vrot.slane %v217, %v221
    %v224 = vadd.f32 %v213, %v222
    %v225 = vadd.f32 %v214, %v222
    %v226 = vadd.f32 %v215, %v222
    %v227 = vadd.f32 %v216, %v222
    %228 = vst [vmem:[#allocation2] sm:$0xff] %v224
    %229 = vst [vmem:[#allocation2 + $0x8] sm:$0xff] %v225
    %230 = vst [vmem:[#allocation2 + $0x10] sm:$0xff] %v226
    %231 = vst [vmem:[#allocation2 + $0x18] sm:$0xff] %v227
    // Predicated region
    $region22: #{overlap_patch_embed.1} parent=1 // pred_check
      _
    $region23: #{overlap_patch_embed.1} parent=1 // pred_check_branch
      %233 = sbr.rel (0) target = $region25
    $region24: #{overlap_patch_embed.1} parent=1 // pred_region
      %s235 = ssub.s32 512, 512
      %236 = vsyncadd [#allocation3], %s235
      %s237 = sshll.u32 [#allocation2], 4
      %s238 = int_to_ptr.vmem [resolvable:$true] %s237
      %243 = dma.vmem_to_hbm [thread:$0]  %s238, 512, %s5, [#allocation3], 128, 128, 8
    $region25: #{overlap_patch_embed.1} parent=1 // pred_fallthru
      _
    // Predicated region
    $region26: #{overlap_patch_embed.1} parent=1 // pred_check
      _
    $region27: #{overlap_patch_embed.1} parent=1 // pred_check_branch
      %245 = sbr.rel (0) target = $region29
    $region28: #{overlap_patch_embed.1} parent=1 // pred_region
      %246 = dma.done [#allocation3], 512
    $region29: #{overlap_patch_embed.1} parent=1 // pred_fallthru
      _
    %247 = vsyncpa [#allocation3], 1

</llo_original>
